<compile_context>
chip_gen: v7x
topology: tpu7x:2x2x1
jax: 0.10.0
libtpu: 0.0.40
codegen_flags: <defaults>
</compile_context>

<pallas_src>
import jax
import jax.numpy as jnp
from jax import lax
from jax.experimental import pallas as pl
from jax.experimental.pallas import tpu as pltpu

_EPS = 1e-8


def _usable_vmem_bytes() -> int:
    """Per-core VMEM budget with headroom for compiler scratch / double buffers."""
    try:
        cap = int(pltpu.get_tpu_info().vmem_capacity_bytes)
    except Exception:  # interpret mode / older runtime: be conservative.
        cap = 64 * 1024 * 1024
    # ~52 MiB on v7x (64 MiB parts), ~105 MiB on v5e/v6e (128 MiB parts).
    return int(cap * 0.82)


def _pick_row_tile(bsz: int, d: int, in_bytes: int, usable: int):
    """Largest aligned row tile whose working set fits the VMEM budget."""
    def est(t):
        slab = 2 * bsz * d * in_bytes          # double-buffered input slab
        dots = 4 * t * bsz * 4                 # f32 dots tile + mask/iota temporaries
        return slab + dots + (1 << 20)         # + misc slack

    candidates = [t for t in (1024, 512, 256, 128, 64, 32, 16, 8) if bsz % t == 0]
    for t in candidates:
        if est(t) <= usable:
            return t, est(t)
    if candidates:
        # TODO(synk): flash-style column tiling with a running max would remove the
        # requirement that a full (bsz, d) slab fits on chip (relevant on v7x).
        t = candidates[-1]
        return t, est(t)
    return bsz, est(bsz)                        # no aligned divisor: single full tile


def koleo_loss(student_global_cls_tokens: jax.Array,
               *, use_bf16_matmul: bool = False) -> jax.Array:
    """student_global_cls_tokens: (bsz, num_global_views, input_size).

    use_bf16_matmul=True halves slab bytes and is ~2-3x faster on the MXU
    (biggest lever on v5e), but sqrt(2 - 2*max_dot) is cancellation-sensitive
    when the nearest neighbor is very similar -- validate tolerance first.
    """
    bsz, num_views, d = student_global_cls_tokens.shape
    if bsz < 2:
        raise ValueError("KoLeoLoss requires batch_size >= 2")

    # ---- wrapper-side: normalize + transpose (+ optional bf16 cast), one fused pass
    x32 = student_global_cls_tokens.astype(jnp.float32)
    inv = lax.rsqrt(jnp.sum(x32 * x32, axis=-1, keepdims=True) + _EPS)
    xn = jnp.transpose(x32 * inv, (1, 0, 2))          # (num_views, bsz, d), unit rows
    if use_bf16_matmul:
        xn = xn.astype(jnp.bfloat16)                   # cast exactly once, in HBM
    in_bytes = 2 if use_bf16_matmul else 4

    usable = _usable_vmem_bytes()
    row_tile, est = _pick_row_tile(bsz, d, in_bytes, usable)
    num_row_tiles = bsz // row_tile if bsz % row_tile == 0 else 1
    if bsz % row_tile != 0:
        row_tile = bsz

    def _koleo_kernel(x_ref, loss_ref):
        # x_ref:   (bsz, d)  pre-normalized slab for the current view (view squeezed)
        # loss_ref:(8, 128)  partial-loss block for this (view, row_tile) step
        r = pl.program_id(1)
        keys = x_ref[...]                               # (bsz, d)

        if num_row_tiles == 1:
            start = 0
            q = keys
        else:
            start = pl.multiple_of(r * row_tile, row_tile)
            q = x_ref[pl.ds(start, row_tile), :]        # (row_tile, d)

        # NT contraction straight on the MXU (no xn.T materialization); f32 acc.
        dots = lax.dot_general(
            q, keys,
            dimension_numbers=(((1,), (1,)), ((), ())),
            preferred_element_type=jnp.float32,
        )                                               # (row_tile, bsz), f32

        # Diagonal mask (torch fill_diagonal_(-1)).
        col = lax.broadcasted_iota(jnp.int32, (row_tile, bsz), 1)
        row = lax.broadcasted_iota(jnp.int32, (row_tile, 1), 0) + start
        dots = jnp.where(col == row, jnp.float32(-1.0), dots)

        # Nearest neighbor via max cosine similarity; for unit-norm rows
        # ||xn_i - xn_j||^2 = 2 - 2*dot_ij, so no argmax / gather is needed.
        m = jnp.max(dots, axis=1, keepdims=True)        # (row_tile, 1)
        dist = jnp.sqrt(jnp.maximum(2.0 - 2.0 * m, 0.0))
        partial = -jnp.sum(jnp.log(dist + _EPS)) * (1.0 / bsz)

        loss_ref[...] = jnp.broadcast_to(partial, loss_ref.shape)

    vmem_limit = int(min(usable, max(32 * 1024 * 1024, 2 * est)))

    out = pl.pallas_call(
        _koleo_kernel,
        out_shape=jax.ShapeDtypeStruct((num_views, num_row_tiles, 8, 128),
                                       jnp.float32),
        grid_spec=pltpu.PrefetchScalarGridSpec(
            num_scalar_prefetch=0,
            grid=(num_views, num_row_tiles),
            in_specs=[pl.BlockSpec((None, bsz, d), lambda v, r: (v, 0, 0))],
            out_specs=pl.BlockSpec((None, None, 8, 128), lambda v, r: (v, r, 0, 0)),
        ),
        compiler_params=pltpu.CompilerParams(
            # Every (view, row_tile) step is independent (per-step output blocks),
            # so both axes can shard across TensorCores on v7x.
            dimension_semantics=("parallel", "parallel"),
            vmem_limit_bytes=vmem_limit,
        ),
    )(xn)

    return jnp.sum(out[:, :, 0, 0])


def _koleo_loss_ref(x: jax.Array) -> jax.Array:
    """Pure-JAX reference mirroring the PyTorch forward (explicit gather)."""
    eps = _EPS
    norm = jnp.sqrt(jnp.sum(x * x, axis=-1, keepdims=True) + eps)
    xn = x / norm
    loss = jnp.float32(0.0)
    for v in range(x.shape[1]):
        s = xn[:, v, :]
        dots = s @ s.T
        b = s.shape[0]
        dots = jnp.where(jnp.eye(b, dtype=bool), -1.0, dots)
        idx = jnp.argmax(dots, axis=1)
        dist = jnp.linalg.norm(s - s[idx], axis=-1)
        loss = loss + (-jnp.mean(jnp.log(dist + eps)))
    return loss


if __name__ == "__main__":
    key = jax.random.PRNGKey(0)
    bsz, num_views, hidden = 8, 2, 32
    x = jax.random.normal(key, (bsz, num_views, hidden), dtype=jnp.float32)

    loss = jax.block_until_ready(koleo_loss(x))
    ref = jax.block_until_ready(_koleo_loss_ref(x))

    assert jnp.isfinite(loss), "kernel produced non-finite loss"
    assert jnp.allclose(loss, ref, rtol=1e-4, atol=1e-4), (loss, ref)
    print("KERNEL_OK")
</pallas_src>

<mosaic_0001>
module attributes {stable_mosaic.version = 11 : i64} {
  func.func @_koleo_kernel(%arg0: i32, %arg1: i32, %arg2: memref<1x8x32xf32, #tpu.memory_space<vmem>>, %arg3: memref<1x1x8x128xf32, #tpu.memory_space<vmem>>) attributes {dimension_semantics = [#tpu.dimension_semantics<parallel>, #tpu.dimension_semantics<parallel>], iteration_bounds = array<i64: 2, 1>, scalar_prefetch = 0 : i64, scratch_operands = 0 : i64, tpu.core_type = #tpu.core_type<tc>, window_params = [{transform_indices = @transform_0, window_bounds = array<i64: 1, 8, 32>}, {transform_indices = @transform_1, window_bounds = array<i64: 1, 1, 8, 128>}]} {
    %c0 = arith.constant 0 : index
    %c0_0 = arith.constant 0 : index
    %c0_1 = arith.constant 0 : index
    %0 = vector.load %arg2[%c0, %c0_0, %c0_1] : memref<1x8x32xf32, #tpu.memory_space<vmem>>, vector<1x8x32xf32>
    %1 = vector.shape_cast %0 : vector<1x8x32xf32> to vector<8x32xf32>
    %cst = arith.constant dense<0.000000e+00> : vector<8x8xf32>
    %2 = tpu.matmul %1, %1, %cst {dimension_numbers = #tpu.dot_dimension_numbers<[1], [1], [0], [0], [0, 0, 1, 0], [], []>} : vector<8x32xf32>, vector<8x32xf32>, vector<8x8xf32> -> vector<8x8xf32>
    %3 = tpu.iota {dimensions = array<i32: 1>} : vector<8x8xi32>
    %4 = tpu.iota {dimensions = array<i32: 0>} : vector<8x1xi32>
    %c0_i32 = arith.constant 0 : i32
    %5 = vector.broadcast %c0_i32 : i32 to vector<8x1xi32>
    %6 = arith.addi %4, %5 : vector<8x1xi32>
    %7 = vector.broadcast %6 : vector<8x1xi32> to vector<8x8xi32>
    %8 = arith.cmpi eq, %3, %7 : vector<8x8xi32>
    %cst_2 = arith.constant -1.000000e+00 : f32
    %9 = vector.broadcast %cst_2 : f32 to vector<8x8xf32>
    %10 = arith.select %8, %9, %2 : vector<8x8xi1>, vector<8x8xf32>
    %cst_3 = arith.constant dense<0xFF800000> : vector<8xf32>
    %11 = vector.multi_reduction <maximumf>, %10, %cst_3 [1] : vector<8x8xf32> to vector<8xf32>
    %12 = vector.shape_cast %11 : vector<8xf32> to vector<8x1xf32>
    %cst_4 = arith.constant 2.000000e+00 : f32
    %13 = vector.broadcast %cst_4 : f32 to vector<8x1xf32>
    %14 = arith.mulf %13, %12 : vector<8x1xf32>
    %cst_5 = arith.constant 2.000000e+00 : f32
    %15 = vector.broadcast %cst_5 : f32 to vector<8x1xf32>
    %16 = arith.subf %15, %14 : vector<8x1xf32>
    %cst_6 = arith.constant 0.000000e+00 : f32
    %17 = vector.broadcast %cst_6 : f32 to vector<8x1xf32>
    %18 = arith.maximumf %16, %17 : vector<8x1xf32>
    %19 = math.sqrt %18 : vector<8x1xf32>
    %cst_7 = arith.constant 9.99999993E-9 : f32
    %20 = vector.broadcast %cst_7 : f32 to vector<8x1xf32>
    %21 = arith.addf %19, %20 : vector<8x1xf32>
    %22 = math.log %21 : vector<8x1xf32>
    %23 = vector.shape_cast %22 : vector<8x1xf32> to vector<1x8x1xf32>
    %cst_8 = arith.constant dense<0.000000e+00> : vector<1xf32>
    %24 = vector.multi_reduction <add>, %23, %cst_8 [1, 2] : vector<1x8x1xf32> to vector<1xf32>
    %25 = vector.shape_cast %24 : vector<1xf32> to vector<1x1x1xf32>
    %26 = vector.extract %25[0, 0, 0] : f32 from vector<1x1x1xf32>
    %cst_9 = arith.constant 0.000000e+00 : f32
    %27 = arith.subf %cst_9, %26 : f32
    %cst_10 = arith.constant 1.250000e-01 : f32
    %28 = arith.mulf %27, %cst_10 : f32
    %29 = vector.broadcast %28 : f32 to vector<8x128xf32>
    %c0_11 = arith.constant 0 : index
    %c0_12 = arith.constant 0 : index
    %c0_13 = arith.constant 0 : index
    %c0_14 = arith.constant 0 : index
    %30 = vector.load %arg3[%c0_11, %c0_12, %c0_13, %c0_14] : memref<1x1x8x128xf32, #tpu.memory_space<vmem>>, vector<1x1x8x128xf32>
    %31 = vector.shape_cast %30 : vector<1x1x8x128xf32> to vector<8x128xf32>
    %32 = vector.shape_cast %29 : vector<8x128xf32> to vector<1x1x8x128xf32>
    tpu.vector_store %arg3[%c0_11, %c0_12, %c0_13, %c0_14], %32 {strides = array<i32>} : memref<1x1x8x128xf32, #tpu.memory_space<vmem>>, vector<1x1x8x128xf32>,
    return
  }
  func.func @transform_0(%arg0: i32, %arg1: i32) -> (i32, i32, i32) {
    %c0_i32 = arith.constant 0 : i32
    %c0_i32_0 = arith.constant 0 : i32
    %c0_i32_1 = arith.constant 0 : i32
    return %arg0, %c0_i32, %c0_i32_0 : i32, i32, i32
  }
  func.func @transform_1(%arg0: i32, %arg1: i32) -> (i32, i32, i32, i32) {
    %c0_i32 = arith.constant 0 : i32
    %c0_i32_0 = arith.constant 0 : i32
    %c0_i32_1 = arith.constant 0 : i32
    return %arg0, %arg1, %c0_i32, %c0_i32_0 : i32, i32, i32, i32
  }
}

</mosaic_0001>

<llo_original>
// kernel: tpu_custom_call.1
$region0: #{tpu_custom_call.1}
  #allocation0 [shape = 'u32[]', space=smem, size = 0x4, offset = 0x4, fixed_abs, tag = 'smem constant byte address 0x4 - core index']
  #allocation1 [shape = 'u32[144,128]{1,0:T(1,128)}', space=vmem, size = 0x12000, scoped, tag = 'internal scratch']
  %s0 = inlined_call_operand.hbm [shape: f32[2,8,32], index: 0, kind: input, shape index: {}]
  %s1 = inlined_call_operand.hbm [shape: f32[2,1,8,128], index: 1, kind: output, shape index: {}]
  %s2 = sld [smem:[#allocation0]]
  $region41: #{tpu_custom_call.1} parent=0
    _
  %s4 = ssub.s32 1, %s2
  %s5 = scalar_select 0, %s4, %s2
  $region1: #{tpu_custom_call.1} parent=0
    #allocation2 [shape = 'u8[8192]{0}', space=vmem, size = 0x2000, scoped, tag = 'input window, operand 0']
    #allocation3 [shape = 's32[2]{0}', space=sflag, size = 0x8, scoped, tag = 'scoped memory for tpu_custom_call.1']
    #allocation4 [shape = 's32[2]{0}', space=sflag, size = 0x8, scoped, tag = 'scoped memory for tpu_custom_call.1']
    #allocation5 [shape = 'u8[8192]{0}', space=vmem, size = 0x2000, scoped, tag = 'output window, operand 0']
    %6 = vsyncpa [#allocation3], 0
    %s7 = scalar_lea.sflag [#allocation3], 1
    %8 = vsyncpa %s7, 0
    %9 = vsyncpa [#allocation4], 0
    %s10 = scalar_lea.sflag [#allocation4], 1
    %11 = vsyncpa %s10, 0
    loop: start=0, step=1, limit=4
    $region2: #{tpu_custom_call.1} parent=1 // loop_pre_header
      _
    $region3: #{tpu_custom_call.1} parent=1 // loop_header
      %s13 = sphi 0, %s17
      %p14 = scmp.ge.s32.totalorder %s13, 4
      %s20 = sphi 0, %s32
      %s21 = sphi 0, %s28
      %s22 = sphi 0, %s20
      %s23 = sphi 0, %s21
      %s24 = sphi 0, %s22
      %s25 = sphi 0, %s23
      %s35 = sphi 0, %s37
      %s38 = sphi 0, %s35
      %s39 = sphi 0, %s38
      %s55 = sphi 0, %s39
      %s63 = sphi 0, %s65
      %s66 = sphi 0, %s63
      %s67 = sphi 0, %s66
      %s83 = sphi 0, %s67
    $region4: #{tpu_custom_call.1} parent=1 // loop_header_branch
      %16 = sbr.rel (%p14) target = $region8
    $region5: #{tpu_custom_call.1} parent=1 // loop_body
      %s18 = ssub.s32 %s13, 1
      %s19 = ssub.s32 %s13, 2
      %s26 = sadd.s32 1, %s21
      %p27 = scmp.ge.s32.totalorder %s26, 1
      %s28 = scalar_select %p27, 0, %s26
      %s29 = sadd.s32 1, %s20
      %s30 = scalar_select %p27, %s29, %s20
      %p31 = scmp.ge.s32.totalorder %s30, 2
      %s32 = scalar_select %p31, 0, %s30
      %s33 = ssub.s32 %s20, %s32
      %p34 = scmp.eq.s32.totalorder %s33, 0
      %s36 = sadd.s32 %s35, 1
      %s37 = scalar_select %p34, %s35, %s36
      %p40 = pneg %p34
      %p41 = scmp.eq.s32.totalorder %s13, 1
      %p42 = por %p40, %p41
      %p43 = scmp.ne.s32.totalorder %s35, %s38
      %p44 = scmp.eq.s32.totalorder %s13, 0
      %p45 = por %p43, %p44
      %p46 = scmp.ne.s32.totalorder %s35, %s38
      %p47 = scmp.eq.s32.totalorder %s18, 1
      %p48 = por %p46, %p47
      %p49 = scmp.ne.s32.totalorder %s38, %s39
      %p50 = scmp.eq.s32.totalorder %s18, 0
      %p51 = por %p49, %p50
      %p52 = scmp.ne.s32.totalorder %s38, %s39
      %p53 = scmp.eq.s32.totalorder %s19, 1
      %p54 = por %p52, %p53
      %p56 = scmp.ne.s32.totalorder %s39, %s55
      %p57 = scmp.eq.s32.totalorder %s19, 0
      %p58 = por %p56, %p57
      %s59 = ssub.s32 %s20, %s32
      %s60 = ssub.s32 %s21, %s28
      %s61 = sor.u32 %s59, %s60
      %p62 = scmp.eq.s32.totalorder %s61, 0
      %s64 = sadd.s32 %s63, 1
      %s65 = scalar_select %p62, %s63, %s64
      %p68 = pneg %p62
      %p69 = scmp.eq.s32.totalorder %s13, 1
      %p70 = por %p68, %p69
      %p71 = scmp.ne.s32.totalorder %s63, %s66
      %p72 = scmp.eq.s32.totalorder %s13, 0
      %p73 = por %p71, %p72
      %p74 = scmp.ne.s32.totalorder %s63, %s66
      %p75 = scmp.eq.s32.totalorder %s18, 1
      %p76 = por %p74, %p75
      %p77 = scmp.ne.s32.totalorder %s66, %s67
      %p78 = scmp.eq.s32.totalorder %s18, 0
      %p79 = por %p77, %p78
      %p80 = scmp.ne.s32.totalorder %s66, %s67
      %p81 = scmp.eq.s32.totalorder %s19, 1
      %p82 = por %p80, %p81
      %p84 = scmp.ne.s32.totalorder %s67, %s83
      %p85 = scmp.eq.s32.totalorder %s19, 0
      %p86 = por %p84, %p85
      %p87 = scmp.le.s32.totalorder 1, %s13
      %p88 = scmp.lt.s32.totalorder %s13, 3
      %p89 = pnand %p87, %p88
      %p90 = pneg %p89
      // Predicated region
      $region9: #{tpu_custom_call.1} parent=5 // pred_check
        _
      $region10: #{tpu_custom_call.1} parent=5 // pred_check_branch
        %92 = sbr.rel (%p89) target = $region12
      $region11: #{tpu_custom_call.1} parent=5 // pred_region
        %s93 = ssub.s32 %s13, 1
      $region12: #{tpu_custom_call.1} parent=5 // pred_fallthru
        _
      %p94 = scmp.lt.s32.totalorder %s13, 2
      // Predicated region
      $region13: #{tpu_custom_call.1} parent=5 // pred_check
        %p95 = pneg %p94
      $region14: #{tpu_custom_call.1} parent=5 // pred_check_branch
        %97 = sbr.rel (%p95) target = $region16
      $region15: #{tpu_custom_call.1} parent=5 // pred_region
        // Predicated region
        $region17: #{tpu_custom_call.1} parent=15 // pred_check
          %p98 = pneg %p45
        $region18: #{tpu_custom_call.1} parent=15 // pred_check_branch
          %100 = sbr.rel (%p98) target = $region20
        $region19: #{tpu_custom_call.1} parent=15 // pred_region
          %s101 = sand.u32 %s35, 1
          %s102 = scalar_lea.sflag [#allocation3], %s101
          %s103 = sand.u32 %s35, 1
          %s104 = smul.addr %s103, 8
          %s105 = scalar_lea.vmem [#allocation2], %s104
          %s107 = ssub.s32 128, 128
          %108 = vsyncadd %s102, %s107
          %s109 = smul.addr %s20, 128
          %s110 = scalar_lea.hbm %s0, %s109
          %s112 = sshll.u32 %s105, 4
          %s113 = int_to_ptr.vmem [resolvable:$true] %s112
          %115 = dma.hbm_to_vmem [thread:$0]  %s110, 128, %s113, %s102
        $region20: #{tpu_custom_call.1} parent=15 // pred_fallthru
          _
      $region16: #{tpu_custom_call.1} parent=5 // pred_fallthru
        _
      %p116 = scmp.le.s32.totalorder 1, %s13
      %p117 = scmp.lt.s32.totalorder %s13, 3
      %p118 = pnand %p116, %p117
      %p119 = pneg %p118
      // Predicated region
      $region21: #{tpu_custom_call.1} parent=5 // pred_check
        _
      $region22: #{tpu_custom_call.1} parent=5 // pred_check_branch
        %121 = sbr.rel (%p118) target = $region24
      $region23: #{tpu_custom_call.1} parent=5 // pred_region
        %s122 = ssub.s32 %s13, 1
        %s123 = sand.u32 %s38, 1
        %s124 = scalar_lea.sflag [#allocation3], %s123
        %s125 = sand.u32 %s38, 1
        %s126 = smul.addr %s125, 8
        %s127 = scalar_lea.vmem [#allocation2], %s126
        // Predicated region
        $region25: #{tpu_custom_call.1} parent=23 // pred_check
          %p128 = pneg %p51
        $region26: #{tpu_custom_call.1} parent=23 // pred_check_branch
          %130 = sbr.rel (%p128) target = $region28
        $region27: #{tpu_custom_call.1} parent=23 // pred_region
          %131 = dma.done %s124, 128
        $region28: #{tpu_custom_call.1} parent=23 // pred_fallthru
          _
        %s132 = sand.u32 %s38, 1
        %s133 = scalar_lea.sflag [#allocation3], %s132
        %s134 = sand.u32 %s38, 1
        %s135 = smul.addr %s134, 8
        %s136 = scalar_lea.vmem [#allocation2], %s135
        %p137 = pneg %p51
        %p138 = pneg %p48
        %p139 = pneg %p79
        %p140 = pneg %p76
        %s141 = sand.u32 %s66, 1
        %s142 = scalar_lea.sflag [#allocation4], %s141
        %s143 = sand.u32 %s66, 1
        %s144 = smul.addr %s143, 8
        %s145 = scalar_lea.vmem [#allocation5], %s144
        %v146 = vld [vmem:[%s127] sm:$0xff]
        %vm147 = vcmask 261120
        %v149 = vsel %vm147, %v146, 0
        %151 = vmatprep.subr.mxu0 0.0
        %152 = vmatpush1.xpose.msra.mxu0 %v149
        %153 = vmatprep.subr.mxu0 0.0
        %154 = vmatpush1.xpose.msra.mxu0 0.0
        %155 = vmatprep.subr.mxu0 0.0
        %156 = vmatpush1.xpose.msra.mxu0 0.0
        %157 = vmatprep.subr.mxu0 0.0
        %158 = vmatpush1.xpose.msra.mxu0 0.0
        %159 = vmatprep.subr.mxu0 0.0
        %160 = vmatpush1.xpose.msra.mxu0 0.0
        %161 = vmatprep.subr.mxu0 0.0
        %162 = vmatpush1.xpose.msra.mxu0 0.0
        %163 = vmatprep.subr.mxu0 0.0
        %164 = vmatpush1.xpose.msra.mxu0 0.0
        %165 = vmatprep.subr.mxu0 0.0
        %166 = vmatpush1.xpose.msra.mxu0 0.0
        %167 = vmatprep.subr.mxu0 0.0
        %168 = vmatpush1.xpose.msra.mxu0 0.0
        %169 = vmatprep.subr.mxu0 0.0
        %170 = vmatpush1.xpose.msra.mxu0 0.0
        %171 = vmatprep.subr.mxu0 0.0
        %172 = vmatpush1.xpose.msra.mxu0 0.0
        %173 = vmatprep.subr.mxu0 0.0
        %174 = vmatpush1.xpose.msra.mxu0 0.0
        %175 = vmatprep.subr.mxu0 0.0
        %176 = vmatpush1.xpose.msra.mxu0 0.0
        %177 = vmatprep.subr.mxu0 0.0
        %178 = vmatpush1.xpose.msra.mxu0 0.0
        %179 = vmatprep.subr.mxu0 0.0
        %180 = vmatpush1.xpose.msra.mxu0 0.0
        %181 = vmatprep.subr.mxu0 0.0
        %182 = vmatpush1.xpose.msra.mxu0 0.0
        %183 = vmatprep.subr.mxu0 0.0
        %184 = vmatpush1.xpose.msra.mxu0 0.0
        %185 = vmatprep.subr.mxu0 0.0
        %186 = vmatpush1.xpose.msra.mxu0 0.0
        %187 = vmatprep.subr.mxu0 0.0
        %188 = vmatpush1.xpose.msra.mxu0 0.0
        %189 = vmatprep.subr.mxu0 0.0
        %190 = vmatpush1.xpose.msra.mxu0 0.0
        %191 = vmatprep.subr.mxu0 0.0
        %192 = vmatpush1.xpose.msra.mxu0 0.0
        %193 = vmatprep.subr.mxu0 0.0
        %194 = vmatpush1.xpose.msra.mxu0 0.0
        %195 = vmatprep.subr.mxu0 0.0
        %196 = vmatpush1.xpose.msra.mxu0 0.0
        %197 = vmatprep.subr.mxu0 0.0
        %198 = vmatpush1.xpose.msra.mxu0 0.0
        %199 = vmatprep.subr.mxu0 0.0
        %200 = vmatpush1.xpose.msra.mxu0 0.0
        %201 = vmatprep.subr.mxu0 0.0
        %202 = vmatpush1.xpose.msra.mxu0 0.0
        %203 = vmatprep.subr.mxu0 0.0
        %204 = vmatpush1.xpose.msra.mxu0 0.0
        %205 = vmatprep.subr.mxu0 0.0
        %206 = vmatpush1.xpose.msra.mxu0 0.0
        %207 = vmatprep.subr.mxu0 0.0
        %208 = vmatpush1.xpose.msra.mxu0 0.0
        %209 = vmatprep.subr.mxu0 0.0
        %210 = vmatpush1.xpose.msra.mxu0 0.0
        %211 = vmatprep.subr.mxu0 0.0
        %212 = vmatpush1.xpose.msra.mxu0 0.0
        %213 = vmatprep.subr.mxu0 0.0
        %214 = vmatpush1.xpose.msra.mxu0 0.0
        %215 = vmatprep.mubr.f32.mxu0 0.0
        %216 = vmatmul.mubr.f32.gmra.mrb[0].mxu0 %v149
        %v217 = vpop.f32.mrb[0].mxu0
        %v218 = vadd.f32 0.0, %v217
        %v219 = vpop.f32.mrb[0].mxu0
        %220 = vdwg.mxu0
        %v221 = vlaneseq
        %v222 = vand.u32 %v221, 127
        %v223 = vlaneseq
        %v224 = vshrl.u32 %v223, 7
        %vm225 = vcmp.eq.s32.totalorder %v222, %v224
        %v226 = vsel %vm225, -1.0, %v218
        %vm227 = vcmask 64512
        %v228 = vsel %vm227, %v226, -inf
        %229 = vmax.xlane.f32.xlu0 %v228
        %v230 = vpop.xlane.xlu0 %229
        %v231 = vmul.f32 %v230, 2.0
        %v232 = vsub.f32 2.0, %v231
        %v233 = vmax.f32 %v232, 0.0
        %v234 = vrsqrt.pop %v233
        %v235 = vmul.f32 %v233, %v234
        %vm236 = vcmp.eq.f32.partialorder %v233, inf
        %v237 = vsel %vm236, %v233, %v235
        %vm238 = vcmp.eq.f32.partialorder %v233, 0.0
        %v239 = vand.u32 %v233, 2147483648
        %v240 = vsel %vm238, %v239, %v237
        %v241 = vadd.f32 %v240, 1e-08
        %v242 = vlog2.pop %v241
        %v243 = vmul.f32 %v242, 0.6931472
        %vm244 = vcmask 7168
        %v245 = vsel %vm244, %v243, 0.0
        %246 = vadd.xlane.f32.xlu0 %v245
        %v247 = vpop.xlane.xlu0 %246
        %v248 = vrot.slane %v247, 4
        %v249 = vadd.f32 %v247, %v248
        %v250 = vrot.slane %v249, 2
        %v251 = vadd.f32 %v249, %v250
        %v252 = vrot.slane %v251, 1
        %v253 = vadd.f32 %v251, %v252
        %s254 = vtos %v253
        %s255 = ssub.f32 0.0, %s254
        %s256 = smul.f32 %s255, 0.125
        %v257 = vstv %s256
        %258 = vst [vmem:[%s145] sm:$0xff] %v257
        %s259 = sand.u32 %s66, 1
        %s260 = scalar_lea.sflag [#allocation4], %s259
        %s261 = sand.u32 %s66, 1
        %s262 = smul.addr %s261, 8
        %s263 = scalar_lea.vmem [#allocation5], %s262
        // Predicated region
        $region29: #{tpu_custom_call.1} parent=23 // pred_check
          %p264 = pneg %p76
        $region30: #{tpu_custom_call.1} parent=23 // pred_check_branch
          %266 = sbr.rel (%p264) target = $region32
        $region31: #{tpu_custom_call.1} parent=23 // pred_region
          %s268 = ssub.s32 128, 128
          %269 = vsyncadd %s260, %s268
          %s270 = sadd.s32 %s23, %s22
          %s271 = smul.addr %s270, 128
          %s272 = scalar_lea.hbm %s1, %s271
          %s274 = sshll.u32 %s263, 4
          %s275 = int_to_ptr.vmem [resolvable:$true] %s274
          %277 = dma.vmem_to_hbm [thread:$0]  %s275, 128, %s272, %s260
        $region32: #{tpu_custom_call.1} parent=23 // pred_fallthru
          _
      $region24: #{tpu_custom_call.1} parent=5 // pred_fallthru
        _
      %p278 = scmp.le.s32.totalorder 2, %s13
      // Predicated region
      $region33: #{tpu_custom_call.1} parent=5 // pred_check
        %p279 = pneg %p278
      $region34: #{tpu_custom_call.1} parent=5 // pred_check_branch
        %281 = sbr.rel (%p279) target = $region36
      $region35: #{tpu_custom_call.1} parent=5 // pred_region
        %s282 = ssub.s32 %s13, 2
        // Predicated region
        $region37: #{tpu_custom_call.1} parent=35 // pred_check
          %p283 = pneg %p82
        $region38: #{tpu_custom_call.1} parent=35 // pred_check_branch
          %285 = sbr.rel (%p283) target = $region40
        $region39: #{tpu_custom_call.1} parent=35 // pred_region
          %s286 = sand.u32 %s67, 1
          %s287 = scalar_lea.sflag [#allocation4], %s286
          %s288 = sand.u32 %s67, 1
          %s289 = smul.addr %s288, 8
          %s290 = scalar_lea.vmem [#allocation5], %s289
          %291 = dma.done %s287, 128
        $region40: #{tpu_custom_call.1} parent=35 // pred_fallthru
          _
      $region36: #{tpu_custom_call.1} parent=5 // pred_fallthru
        _
    $region6: #{tpu_custom_call.1} parent=1 // loop_footer
      %s17 = sadd.s32 1, %s13
    $region7: #{tpu_custom_call.1} parent=1 // loop_footer_branch
      %12 = sbr.rel target = $region3
    $region8: #{tpu_custom_call.1} parent=1 // loop_exit
      _
    %292 = vsyncpa [#allocation3], 1
    %s293 = scalar_lea.sflag [#allocation3], 1
    %294 = vsyncpa %s293, 1
    %295 = vsyncpa [#allocation4], 1
    %s296 = scalar_lea.sflag [#allocation4], 1
    %297 = vsyncpa %s296, 1

</llo_original>
